<compile_context>
chip_gen: v6e
topology: v6e:2x2x1
jax: 0.10.0
libtpu: 0.0.40
codegen_flags: <defaults>
</compile_context>

<pallas_src>
import math

import jax
import jax.numpy as jnp
from jax.experimental import pallas as pl
from jax.experimental.pallas import tpu as pltpu


# ---------------------------------------------------------------------------
# Single-step LSTM cell kernel (Encoder.forward)
# ---------------------------------------------------------------------------
def _lstm_cell_kernel(combined_ref, c_ref, w_ref, b_ref, h_out_ref, c_out_ref):
    H = c_ref.shape[1]

    # One fused MXU matmul: (B, I+H) @ (I+H, 4H) -> (B, 4H), f32 accumulation.
    z = (
        jnp.dot(combined_ref[...], w_ref[...], preferred_element_type=jnp.float32)
        + b_ref[...]
    )

    # Two full-width activations on the lane-dense (B, 4H) slab, then slice.
    sig = jax.nn.sigmoid(z)
    th = jnp.tanh(z)
    f = sig[:, 0:H]
    i = sig[:, H:2 * H]
    o = sig[:, 2 * H:3 * H]
    C = th[:, 3 * H:4 * H]

    c_new = f * c_ref[...] + i * C
    h_new = o * jnp.tanh(c_new)

    c_out_ref[...] = c_new.astype(c_out_ref.dtype)
    h_out_ref[...] = h_new.astype(h_out_ref.dtype)


def encoder_forward(x, hidden_state, cell_state, params):
    """One Encoder.forward step. Returns (Hidden_State, Cell_State)."""
    B = x.shape[0]
    H = hidden_state.shape[1]

    # Pre-concatenate [x, h] and the fused weights in XLA (zero marginal cost).
    combined = jnp.concatenate([x, hidden_state], axis=1)          # (B, I+H)
    w_all = jnp.concatenate([params["wx"], params["wh"]], axis=0)  # (I+H, 4H)
    b_all = params["b"]                                            # (1, 4H)

    vmem = pl.BlockSpec(memory_space=pltpu.MemorySpace.VMEM)
    h_new, c_new = pl.pallas_call(
        _lstm_cell_kernel,
        out_shape=(
            jax.ShapeDtypeStruct((B, H), jnp.float32),
            jax.ShapeDtypeStruct((B, H), jnp.float32),
        ),
        in_specs=[vmem, vmem, vmem, vmem],
        out_specs=(vmem, vmem),
        # Reuse the Cell_State buffer for the new cell state (in-place update).
        input_output_aliases={1: 1},
    )(combined, cell_state, w_all, b_all)
    return h_new, c_new


# ---------------------------------------------------------------------------
# Fused time-loop kernel (Encoder.loop): one pallas_call over grid=(T,)
# ---------------------------------------------------------------------------
def _lstm_seq_kernel(x_ref, wx_ref, wh_ref, b_ref, h_ref, c_ref):
    t = pl.program_id(0)
    H = h_ref.shape[1]

    # initHidden: zero state at the first step.
    @pl.when(t == 0)
    def _():
        h_ref[...] = jnp.zeros_like(h_ref)
        c_ref[...] = jnp.zeros_like(c_ref)

    x = x_ref[0]          # (B, I) — current time step
    h = h_ref[...]
    c = c_ref[...]

    # Fused-gate pre-activation: two MXU calls (x and h parts), f32 accumulate.
    z = (
        jnp.dot(x, wx_ref[...], preferred_element_type=jnp.float32)
        + jnp.dot(h, wh_ref[...], preferred_element_type=jnp.float32)
        + b_ref[...]
    )

    sig = jax.nn.sigmoid(z)
    th = jnp.tanh(z)
    f = sig[:, 0:H]
    i = sig[:, H:2 * H]
    o = sig[:, 2 * H:3 * H]
    C = th[:, 3 * H:4 * H]

    c_new = f * c + i * C
    h_new = o * jnp.tanh(c_new)

    c_ref[...] = c_new
    h_ref[...] = h_new


def encoder_loop(inputs, params):
    """Mirrors Encoder.loop: zero-init state, run all T steps in ONE kernel.

    inputs: (B, T, input_size).  Returns final (Hidden_State, Cell_State).
    """
    B, T, I = inputs.shape
    H4 = params["wx"].shape[1]
    H = H4 // 4

    seq = jnp.transpose(inputs, (1, 0, 2))  # (T, B, I): time = leading grid axis

    h_T, c_T = pl.pallas_call(
        _lstm_seq_kernel,
        out_shape=(
            jax.ShapeDtypeStruct((B, H), jnp.float32),
            jax.ShapeDtypeStruct((B, H), jnp.float32),
        ),
        grid=(T,),
        in_specs=[
            pl.BlockSpec((1, B, I), lambda t: (t, 0, 0)),  # x_t streamed per step
            pl.BlockSpec((I, H4), lambda t: (0, 0)),       # Wx: VMEM-resident
            pl.BlockSpec((H, H4), lambda t: (0, 0)),       # Wh: VMEM-resident
            pl.BlockSpec((1, H4), lambda t: (0, 0)),       # bias: VMEM-resident
        ],
        out_specs=(
            pl.BlockSpec((B, H), lambda t: (0, 0)),        # h state (revisited block)
            pl.BlockSpec((B, H), lambda t: (0, 0)),        # c state (revisited block)
        ),
        compiler_params=pltpu.CompilerParams(
            dimension_semantics=("arbitrary",)              # sequential recurrence
        ),
    )(seq, params["wx"], params["wh"], params["b"])
    return h_T, c_T


# ---------------------------------------------------------------------------
# Parameter init (matches nn.Linear default U(-1/sqrt(fan_in), 1/sqrt(fan_in)),
# stored pre-transposed and fused across the 4 gates in order [f, i, o, C]).
# ---------------------------------------------------------------------------
def init_encoder_params(key, input_size, hidden_size):
    fan_in = input_size + hidden_size
    bound = 1.0 / math.sqrt(fan_in)
    k1, k2, k3 = jax.random.split(key, 3)
    return {
        "wx": jax.random.uniform(
            k1, (input_size, 4 * hidden_size), jnp.float32, -bound, bound
        ),
        "wh": jax.random.uniform(
            k2, (hidden_size, 4 * hidden_size), jnp.float32, -bound, bound
        ),
        "b": jax.random.uniform(
            k3, (1, 4 * hidden_size), jnp.float32, -bound, bound
        ),
    }


def _reference_forward(x, h, c, params):
    """Pure-JAX reference (same math as the torch module)."""
    H = h.shape[1]
    z = x @ params["wx"] + h @ params["wh"] + params["b"]
    f = jax.nn.sigmoid(z[:, 0:H])
    i = jax.nn.sigmoid(z[:, H:2 * H])
    o = jax.nn.sigmoid(z[:, 2 * H:3 * H])
    C = jnp.tanh(z[:, 3 * H:4 * H])
    c_new = f * c + i * C
    h_new = o * jnp.tanh(c_new)
    return h_new, c_new


if __name__ == "__main__":
    B = 8            # batch
    INPUT_SIZE = 16  # input_size
    HIDDEN = 32      # hidden_size (4*H = 128 -> lane-dense pre-activation)
    T = 12           # time steps for the fused-loop test

    key = jax.random.PRNGKey(0)
    key, kx, kseq, kp = jax.random.split(key, 4)

    params = init_encoder_params(kp, INPUT_SIZE, HIDDEN)

    x = jax.random.normal(kx, (B, INPUT_SIZE), jnp.float32)
    seq = jax.random.normal(kseq, (B, T, INPUT_SIZE), jnp.float32)
    hidden0 = jnp.zeros((B, HIDDEN), jnp.float32)  # initHidden
    cell0 = jnp.zeros((B, HIDDEN), jnp.float32)

    # References first (the kernel donates the cell-state buffer afterwards).
    h_ref, c_ref = _reference_forward(x, hidden0, cell0, params)
    hs, cs = hidden0, cell0
    for t in range(T):
        hs, cs = _reference_forward(seq[:, t, :], hs, cs, params)

    # Single-step forward kernel.
    h_new, c_new = encoder_forward(x, hidden0, cell0, params)
    jax.block_until_ready((h_new, c_new))
    assert jnp.allclose(h_new, h_ref, atol=1e-5, rtol=1e-5)
    assert jnp.allclose(c_new, c_ref, atol=1e-5, rtol=1e-5)

    # Fused time-loop kernel (Encoder.loop semantics).
    h_T, c_T = encoder_loop(seq, params)
    jax.block_until_ready((h_T, c_T))
    assert jnp.allclose(h_T, hs, atol=1e-4, rtol=1e-4)
    assert jnp.allclose(c_T, cs, atol=1e-4, rtol=1e-4)

    print("KERNEL_OK")
</pallas_src>

<mosaic_0001>
module attributes {stable_mosaic.version = 11 : i64} {
  func.func @_lstm_cell_kernel(%arg0: memref<8x48xf32, #tpu.memory_space<vmem>>, %arg1: memref<8x32xf32, #tpu.memory_space<vmem>>, %arg2: memref<48x128xf32, #tpu.memory_space<vmem>>, %arg3: memref<1x128xf32, #tpu.memory_space<vmem>>, %arg4: memref<8x32xf32, #tpu.memory_space<vmem>>, %arg5: memref<8x32xf32, #tpu.memory_space<vmem>>) attributes {dimension_semantics = [], scalar_prefetch = 0 : i64, scratch_operands = 0 : i64, tpu.core_type = #tpu.core_type<tc>} {
    %c0 = arith.constant 0 : index
    %c0_0 = arith.constant 0 : index
    %0 = vector.load %arg0[%c0, %c0_0] : memref<8x48xf32, #tpu.memory_space<vmem>>, vector<8x48xf32>
    %c0_1 = arith.constant 0 : index
    %c0_2 = arith.constant 0 : index
    %1 = vector.load %arg2[%c0_1, %c0_2] : memref<48x128xf32, #tpu.memory_space<vmem>>, vector<48x128xf32>
    %cst = arith.constant dense<0.000000e+00> : vector<8x128xf32>
    %2 = tpu.matmul %0, %1, %cst {dimension_numbers = #tpu.dot_dimension_numbers<[1], [0], [0], [1], [0, 0, 1, 1], [], []>} : vector<8x48xf32>, vector<48x128xf32>, vector<8x128xf32> -> vector<8x128xf32>
    %c0_3 = arith.constant 0 : index
    %c0_4 = arith.constant 0 : index
    %3 = vector.load %arg3[%c0_3, %c0_4] : memref<1x128xf32, #tpu.memory_space<vmem>>, vector<1x128xf32>
    %4 = vector.broadcast %3 : vector<1x128xf32> to vector<8x128xf32>
    %5 = arith.addf %2, %4 : vector<8x128xf32>
    %6 = arith.negf %5 : vector<8x128xf32>
    %7 = math.exp %6 : vector<8x128xf32>
    %cst_5 = arith.constant 1.000000e+00 : f32
    %8 = vector.broadcast %cst_5 : f32 to vector<8x128xf32>
    %9 = arith.addf %8, %7 : vector<8x128xf32>
    %10 = arith.divf %8, %9 : vector<8x128xf32>
    %11 = math.tanh %5 : vector<8x128xf32>
    %12 = vector.extract_strided_slice %10 {offsets = [0, 0], sizes = [8, 32], strides = [1, 1]} : vector<8x128xf32> to vector<8x32xf32>
    %13 = vector.extract_strided_slice %10 {offsets = [0, 32], sizes = [8, 32], strides = [1, 1]} : vector<8x128xf32> to vector<8x32xf32>
    %14 = vector.extract_strided_slice %10 {offsets = [0, 64], sizes = [8, 32], strides = [1, 1]} : vector<8x128xf32> to vector<8x32xf32>
    %15 = vector.extract_strided_slice %11 {offsets = [0, 96], sizes = [8, 32], strides = [1, 1]} : vector<8x128xf32> to vector<8x32xf32>
    %c0_6 = arith.constant 0 : index
    %c0_7 = arith.constant 0 : index
    %16 = vector.load %arg1[%c0_6, %c0_7] : memref<8x32xf32, #tpu.memory_space<vmem>>, vector<8x32xf32>
    %17 = arith.mulf %12, %16 : vector<8x32xf32>
    %18 = arith.mulf %13, %15 : vector<8x32xf32>
    %19 = arith.addf %17, %18 : vector<8x32xf32>
    %20 = math.tanh %19 : vector<8x32xf32>
    %21 = arith.mulf %14, %20 : vector<8x32xf32>
    %c0_8 = arith.constant 0 : index
    %c0_9 = arith.constant 0 : index
    %22 = vector.load %arg5[%c0_8, %c0_9] : memref<8x32xf32, #tpu.memory_space<vmem>>, vector<8x32xf32>
    tpu.vector_store %arg5[%c0_8, %c0_9], %19 {strides = array<i32>} : memref<8x32xf32, #tpu.memory_space<vmem>>, vector<8x32xf32>,
    %c0_10 = arith.constant 0 : index
    %c0_11 = arith.constant 0 : index
    %23 = vector.load %arg4[%c0_10, %c0_11] : memref<8x32xf32, #tpu.memory_space<vmem>>, vector<8x32xf32>
    tpu.vector_store %arg4[%c0_10, %c0_11], %21 {strides = array<i32>} : memref<8x32xf32, #tpu.memory_space<vmem>>, vector<8x32xf32>,
    return
  }
}

</mosaic_0001>

<llo_original>
// kernel: tpu_custom_call.1
$region0: #{tpu_custom_call.1}
  #allocation0 [shape = 'u32[]', space=smem, size = 0x4, offset = 0x4, fixed_abs, tag = 'smem constant byte address 0x4 - core index']
  #allocation1 [shape = 'u32[144,128]{1,0:T(1,128)}', space=vmem, size = 0x12000, scoped, tag = 'internal scratch']
  %s0 = inlined_call_operand.vmem [shape: f32[8,48], index: 0, kind: input, shape index: {}]
  %s1 = inlined_call_operand.hbm [shape: f32[8,32], index: 1, kind: input, shape index: {}, may-alias: {1,5}]
  %s2 = inlined_call_operand.hbm [shape: f32[48,128], index: 2, kind: input, shape index: {}]
  %s3 = inlined_call_operand.vmem [shape: f32[1,128], index: 3, kind: input, shape index: {}]
  %s4 = inlined_call_operand.hbm [shape: f32[8,32], index: 4, kind: output, shape index: {0}]
  %s5 = inlined_call_operand.hbm [shape: f32[8,32], index: 5, kind: output, shape index: {1}, may-alias: {1,5}]
  %6 = xla_tuple %s4, %s5
  %s7 = sld [smem:[#allocation0]]
  $region42: #{tpu_custom_call.1} parent=0
    _
  %s9 = ssub.s32 1, %s7
  %s10 = scalar_select 0, %s9, %s7
  $region1: #{tpu_custom_call.1} parent=0
    #allocation2 [shape = 'u8[4096]{0}', space=vmem, size = 0x1000, scoped, tag = 'input window, operand 1, single buffered']
    #allocation3 [shape = 's32[1]{0}', space=sflag, size = 0x4, scoped, tag = 'scoped memory for tpu_custom_call.1']
    #allocation4 [shape = 's32[1]{0}', space=sflag, size = 0x4, scoped, tag = 'scoped memory for tpu_custom_call.1']
    #allocation5 [shape = 'u8[24576]{0}', space=vmem, size = 0x6000, scoped, tag = 'input window, operand 2, single buffered']
    #allocation6 [shape = 's32[1]{0}', space=sflag, size = 0x4, scoped, tag = 'scoped memory for tpu_custom_call.1']
    #allocation7 [shape = 'u8[4096]{0}', space=vmem, size = 0x1000, scoped, tag = 'output window, operand 0, single buffered']
    #allocation8 [shape = 'u8[4096]{0}', space=vmem, size = 0x1000, scoped, tag = 'output window, operand 1, single buffered']
    #allocation9 [shape = 's32[1]{0}', space=sflag, size = 0x4, scoped, tag = 'scoped memory for tpu_custom_call.1']
    %11 = vsyncpa [#allocation3], 0
    %12 = vsyncpa [#allocation6], 0
    %13 = vsyncpa [#allocation4], 0
    %14 = vsyncpa [#allocation9], 0
    // Predicated region
    $region2: #{tpu_custom_call.1} parent=1 // pred_check
      _
    $region3: #{tpu_custom_call.1} parent=1 // pred_check_branch
      %16 = sbr.rel (0) target = $region5
    $region4: #{tpu_custom_call.1} parent=1 // pred_region
      _
    $region5: #{tpu_custom_call.1} parent=1 // pred_fallthru
      _
    // Predicated region
    $region6: #{tpu_custom_call.1} parent=1 // pred_check
      _
    $region7: #{tpu_custom_call.1} parent=1 // pred_check_branch
      %18 = sbr.rel (0) target = $region9
    $region8: #{tpu_custom_call.1} parent=1 // pred_region
      %s20 = ssub.s32 128, 128
      %21 = vsyncadd [#allocation3], %s20
      %s23 = sshll.u32 [#allocation2], 4
      %s24 = int_to_ptr.vmem [resolvable:$true] %s23
      %26 = dma.hbm_to_vmem [thread:$0]  %s1, 128, %s24, [#allocation3]
    $region9: #{tpu_custom_call.1} parent=1 // pred_fallthru
      _
    // Predicated region
    $region10: #{tpu_custom_call.1} parent=1 // pred_check
      _
    $region11: #{tpu_custom_call.1} parent=1 // pred_check_branch
      %28 = sbr.rel (0) target = $region13
    $region12: #{tpu_custom_call.1} parent=1 // pred_region
      %s30 = ssub.s32 768, 768
      %31 = vsyncadd [#allocation6], %s30
      %s32 = sshll.u32 [#allocation5], 4
      %s33 = int_to_ptr.vmem [resolvable:$true] %s32
      %38 = dma.hbm_to_vmem [thread:$0]  %s2, 768, %s33, [#allocation6], 128, 128, 8
    $region13: #{tpu_custom_call.1} parent=1 // pred_fallthru
      _
    // Predicated region
    $region14: #{tpu_custom_call.1} parent=1 // pred_check
      _
    $region15: #{tpu_custom_call.1} parent=1 // pred_check_branch
      %40 = sbr.rel (0) target = $region17
    $region16: #{tpu_custom_call.1} parent=1 // pred_region
      _
    $region17: #{tpu_custom_call.1} parent=1 // pred_fallthru
      _
    // Predicated region
    $region18: #{tpu_custom_call.1} parent=1 // pred_check
      _
    $region19: #{tpu_custom_call.1} parent=1 // pred_check_branch
      %42 = sbr.rel (0) target = $region21
    $region20: #{tpu_custom_call.1} parent=1 // pred_region
      %43 = dma.done [#allocation3], 128
    $region21: #{tpu_custom_call.1} parent=1 // pred_fallthru
      _
    // Predicated region
    $region22: #{tpu_custom_call.1} parent=1 // pred_check
      _
    $region23: #{tpu_custom_call.1} parent=1 // pred_check_branch
      %45 = sbr.rel (0) target = $region25
    $region24: #{tpu_custom_call.1} parent=1 // pred_region
      %46 = dma.done [#allocation6], 768
    $region25: #{tpu_custom_call.1} parent=1 // pred_fallthru
      _
    %v47 = vld [vmem:[%s0] sm:$0xff]
    %v48 = vld [vmem:[#allocation5] sm:$0xff]
    %v49 = vld [vmem:[#allocation5 + $0x8] sm:$0xff]
    %v50 = vld [vmem:[#allocation5 + $0x10] sm:$0xff]
    %v51 = vld [vmem:[#allocation5 + $0x18] sm:$0xff]
    %v52 = vld [vmem:[#allocation5 + $0x20] sm:$0xff]
    %v53 = vld [vmem:[#allocation5 + $0x28] sm:$0xff]
    %v54 = vld [vmem:[%s3] sm:$0x1]
    %v56 = vlaneseq
    %v57 = vshrl.u32 %v56, 7
    %v58 = vsub.s32 0, %v57
    %v59 = vrot.slane %v54, %v58
    %vm61 = vcmask 392192
    %v63 = vsel %vm61, %v47, 0
    %65 = vmatprep.subr.mxu0 0.0
    %66 = vmatpush1.msra.mxu0 0.0
    %67 = vmatprep.subr.mxu0 0.0
    %68 = vmatpush1.msra.mxu0 0.0
    %69 = vmatprep.subr.mxu0 0.0
    %70 = vmatpush1.msra.mxu0 0.0
    %71 = vmatprep.subr.mxu0 0.0
    %72 = vmatpush1.msra.mxu0 0.0
    %73 = vmatprep.subr.mxu0 0.0
    %74 = vmatpush1.msra.mxu0 0.0
    %75 = vmatprep.subr.mxu0 0.0
    %76 = vmatpush1.msra.mxu0 0.0
    %77 = vmatprep.subr.mxu0 0.0
    %78 = vmatpush1.msra.mxu0 0.0
    %79 = vmatprep.subr.mxu0 0.0
    %80 = vmatpush1.msra.mxu0 0.0
    %81 = vmatprep.subr.mxu0 0.0
    %82 = vmatpush1.msra.mxu0 0.0
    %83 = vmatprep.subr.mxu0 0.0
    %84 = vmatpush1.msra.mxu0 0.0
    %85 = vmatprep.subr.mxu0 0.0
    %86 = vmatpush1.msra.mxu0 %v53
    %87 = vmatprep.subr.mxu0 0.0
    %88 = vmatpush1.msra.mxu0 %v52
    %89 = vmatprep.subr.mxu0 0.0
    %90 = vmatpush1.msra.mxu0 %v51
    %91 = vmatprep.subr.mxu0 0.0
    %92 = vmatpush1.msra.mxu0 %v50
    %93 = vmatprep.subr.mxu0 0.0
    %94 = vmatpush1.msra.mxu0 %v49
    %95 = vmatprep.subr.mxu0 0.0
    %96 = vmatpush1.msra.mxu0 %v48
    %97 = vmatprep.subr.mxu0 0.0
    %98 = vmatpush2.msra.mxu0 0.0
    %99 = vmatprep.subr.mxu0 0.0
    %100 = vmatpush2.msra.mxu0 0.0
    %101 = vmatprep.subr.mxu0 0.0
    %102 = vmatpush2.msra.mxu0 0.0
    %103 = vmatprep.subr.mxu0 0.0
    %104 = vmatpush2.msra.mxu0 0.0
    %105 = vmatprep.subr.mxu0 0.0
    %106 = vmatpush2.msra.mxu0 0.0
    %107 = vmatprep.subr.mxu0 0.0
    %108 = vmatpush2.msra.mxu0 0.0
    %109 = vmatprep.subr.mxu0 0.0
    %110 = vmatpush2.msra.mxu0 0.0
    %111 = vmatprep.subr.mxu0 0.0
    %112 = vmatpush2.msra.mxu0 0.0
    %113 = vmatprep.subr.mxu0 0.0
    %114 = vmatpush2.msra.mxu0 0.0
    %115 = vmatprep.subr.mxu0 0.0
    %116 = vmatpush2.msra.mxu0 0.0
    %117 = vmatprep.subr.mxu0 0.0
    %118 = vmatpush2.msra.mxu0 0.0
    %119 = vmatprep.subr.mxu0 0.0
    %120 = vmatpush2.msra.mxu0 0.0
    %121 = vmatprep.subr.mxu0 0.0
    %122 = vmatpush2.msra.mxu0 0.0
    %123 = vmatprep.subr.mxu0 0.0
    %124 = vmatpush2.msra.mxu0 0.0
    %125 = vmatprep.subr.mxu0 0.0
    %126 = vmatpush2.msra.mxu0 0.0
    %127 = vmatprep.subr.mxu0 0.0
    %128 = vmatpush2.msra.mxu0 0.0
    %129 = vmatprep.mubr.f32.mxu0 0.0
    %130 = vmatmul.mubr.f32.gmra.mxu0 %v63
    %v131 = vpop.f32.mrf.mxu0
    %v132 = vadd.f32 %v59, %v131
    %v133 = vpop.f32.mrf.mxu0
    %134 = vdwg.mxu0
    %v135 = vxor.u32 %v132, 2147483648
    %v136 = vmul.f32 %v135, 1.442695
    %v137 = vpow.pop %v136
    %v138 = vadd.f32 %v137, 1.0
    %v139 = vrcp.pop %v138
    %v140 = vmul.f32 1.0, %v139
    %v141 = vtanh.pop %v132
    %v142 = vld [vmem:[#allocation2] sm:$0xff]
    %v143 = vmul.f32 %v140, %v142
    %145 = vrot.lane.b32.xlu0 %v141, 64
    %v146 = vpop.permute.xlu0 %145
    %v148 = vmul.f32 %v140, %v146
    %150 = vrot.lane.b32.xlu0 %v148, 96
    %v151 = vpop.permute.xlu0 %150
    %v153 = vadd.f32 %v143, %v151
    %v154 = vtanh.pop %v153
    %156 = vrot.lane.b32.xlu0 %v154, 64
    %v157 = vpop.permute.xlu0 %156
    %v159 = vmul.f32 %v140, %v157
    %vm160 = vcmask 261120
    %161 = vst.msk [vmem:[#allocation8] sm:$0xff] %vm160, %v153
    %163 = vrot.lane.b32.xlu0 %v159, 64
    %v164 = vpop.permute.xlu0 %163
    %166 = vst.msk [vmem:[#allocation7] sm:$0xff] %vm160, %v164
    // Predicated region
    $region26: #{tpu_custom_call.1} parent=1 // pred_check
      _
    $region27: #{tpu_custom_call.1} parent=1 // pred_check_branch
      %168 = sbr.rel (0) target = $region29
    $region28: #{tpu_custom_call.1} parent=1 // pred_region
      %s170 = ssub.s32 128, 128
      %171 = vsyncadd [#allocation4], %s170
      %s173 = sshll.u32 [#allocation7], 4
      %s174 = int_to_ptr.vmem [resolvable:$true] %s173
      %176 = dma.vmem_to_hbm [thread:$0]  %s174, 128, %s4, [#allocation4]
    $region29: #{tpu_custom_call.1} parent=1 // pred_fallthru
      _
    // Predicated region
    $region30: #{tpu_custom_call.1} parent=1 // pred_check
      _
    $region31: #{tpu_custom_call.1} parent=1 // pred_check_branch
      %178 = sbr.rel (0) target = $region33
    $region32: #{tpu_custom_call.1} parent=1 // pred_region
      %s180 = ssub.s32 128, 128
      %181 = vsyncadd [#allocation9], %s180
      %s183 = sshll.u32 [#allocation8], 4
      %s184 = int_to_ptr.vmem [resolvable:$true] %s183
      %186 = dma.vmem_to_hbm [thread:$0]  %s184, 128, %s5, [#allocation9]
    $region33: #{tpu_custom_call.1} parent=1 // pred_fallthru
      _
    // Predicated region
    $region34: #{tpu_custom_call.1} parent=1 // pred_check
      _
    $region35: #{tpu_custom_call.1} parent=1 // pred_check_branch
      %188 = sbr.rel (0) target = $region37
    $region36: #{tpu_custom_call.1} parent=1 // pred_region
      %189 = dma.done [#allocation4], 128
    $region37: #{tpu_custom_call.1} parent=1 // pred_fallthru
      _
    // Predicated region
    $region38: #{tpu_custom_call.1} parent=1 // pred_check
      _
    $region39: #{tpu_custom_call.1} parent=1 // pred_check_branch
      %191 = sbr.rel (0) target = $region41
    $region40: #{tpu_custom_call.1} parent=1 // pred_region
      %192 = dma.done [#allocation9], 128
    $region41: #{tpu_custom_call.1} parent=1 // pred_fallthru
      _
    %193 = vsyncpa [#allocation3], 1
    %194 = vsyncpa [#allocation6], 1
    %195 = vsyncpa [#allocation4], 1
    %196 = vsyncpa [#allocation9], 1

</llo_original>
